<compile_context>
chip_gen: v7x
topology: tpu7x:2x2x1
jax: 0.10.0
libtpu: 0.0.40
codegen_flags: <defaults>
</compile_context>

<pallas_src>
import functools

import jax
import jax.numpy as jnp
from jax.experimental import pallas as pl
from jax.experimental.pallas import tpu as pltpu

LANE = 128  # TPU lane width; fc1 width == 128 makes all hidden tiles lane-dense


def mlp_kernel(x_ref, w1_ref, w2_ref, w3_ref, b_ref, o_ref):
    """One batch tile of the 3-layer MLP.

    x_ref : (TB, D)     f32   streamed per grid step, cast to bf16 in-kernel
    w1_ref: (D, 128)    bf16  VMEM-resident across the grid
    w2_ref: (128, 128)  bf16  resident, columns past H2 zero-padded
    w3_ref: (128, 128)  bf16  resident, rows past H2 / cols past C zero-padded
    b_ref : (3, 128)    f32   rows = [b1 | b2 zero-padded | b3 zero-padded]
    o_ref : (TB, 128)   out_dtype  lane-dense output tile
    """
    # In-kernel f32 -> bf16 cast: free filler on the VPU, saves a wrapper pass.
    x = x_ref[...].astype(jnp.bfloat16)

    # fc1 + ReLU  (bf16 operands, f32 accumulation on the MXU)
    h1 = jnp.dot(x, w1_ref[...], preferred_element_type=jnp.float32)
    h1 = jnp.maximum(h1 + b_ref[0:1, :], 0.0)

    # fc2 + ReLU  (H2 padded to 128 -> full-lane bias add, no masked slice)
    h2 = jnp.dot(h1.astype(jnp.bfloat16), w2_ref[...],
                 preferred_element_type=jnp.float32)
    h2 = jnp.maximum(h2 + b_ref[1:2, :], 0.0)

    # fc3 (classes padded to 128 lanes -> unmasked full-lane stores)
    out = jnp.dot(h2.astype(jnp.bfloat16), w3_ref[...],
                  preferred_element_type=jnp.float32)
    o_ref[...] = (out + b_ref[2:3, :]).astype(o_ref.dtype)


def prepare_params(params):
    """Call-once preprocessing: pad + fold + bf16-cast the weights/biases.

    Weights are stored (in_features, out_features) so the kernel computes
    y = x @ W + b (equivalent to PyTorch's x @ W.T with (out, in) storage).
    Returns (w1b, w2b, w3b, b_all) ready to feed to `simple_mlp_forward`.
    """
    w1, b1, w2, b2, w3, b3 = params
    H1 = w1.shape[1]
    H2 = w2.shape[1]
    C = w3.shape[1]
    assert H1 == LANE, "bias folding assumes fc1 width == 128"
    assert H2 <= LANE and C <= LANE, "fc2/fc3 widths must fit one lane group"

    # Zero-pad H2 (64 -> 128) and the class dim (C -> 128). Exact numerics:
    # zero columns contribute zero through ReLU and fc3.
    w2p = jnp.pad(w2, ((0, 0), (0, LANE - H2)))
    b2p = jnp.pad(b2, ((0, 0), (0, LANE - H2)))
    w3p = jnp.pad(w3, ((0, LANE - H2), (0, LANE - C)))
    b3p = jnp.pad(b3, ((0, 0), (0, LANE - C)))

    # Fold the three biases into one (3, 128) f32 tile: one DMA, full-lane adds.
    b_all = jnp.concatenate([b1, b2p, b3p], axis=0).astype(jnp.float32)

    return (w1.astype(jnp.bfloat16),
            w2p.astype(jnp.bfloat16),
            w3p.astype(jnp.bfloat16),
            b_all)


def _choose_batch_tiling(batch, tb_max=512):
    """Pick (tile, n_tiles): tile % 16 == 0, big tiles, >=2 tiles when possible."""
    bp = -(-batch // 16) * 16                 # round up to a multiple of 16
    if bp <= 32:
        return bp, 1                          # too small to split usefully
    if bp <= 2 * tb_max:
        tb = -(-bp // 32) * 16                # ceil(bp/2), multiple of 16
        return tb, 2                          # keeps both v7x TCs busy
    return tb_max, -(-bp // tb_max)


def simple_mlp_forward(x, prepared, num_classes, *,
                       out_dtype=jnp.bfloat16, core_parallel=False):
    """y = relu(x@W1+b1) -> relu(.@W2+b2) -> .@W3+b3 via one pallas_call.

    `prepared` must come from `prepare_params` (padded / folded / bf16 weights).
    out_dtype=jnp.bfloat16 halves output writeback (dominant HBM traffic);
    pass jnp.float32 for full-precision logits.
    """
    w1b, w2b, w3b, b_all = prepared
    B, D = x.shape
    assert w1b.shape[0] == D

    tb, n_tiles = _choose_batch_tiling(B)
    b_pad = tb * n_tiles
    xp = x if b_pad == B else jnp.pad(x, ((0, b_pad - B), (0, 0)))

    # "parallel" vs "arbitrary" barely changes codegen; CORE_PARALLEL is what
    # actually core-shards the batch axis across v7x's 2 TensorCores.
    sem = pltpu.CORE_PARALLEL if core_parallel else pltpu.PARALLEL

    out = pl.pallas_call(
        mlp_kernel,
        out_shape=jax.ShapeDtypeStruct((b_pad, LANE), out_dtype),
        grid=(n_tiles,),
        in_specs=[
            pl.BlockSpec((tb, D), lambda i: (i, 0)),        # x: streamed tile
            pl.BlockSpec(w1b.shape, lambda i: (0, 0)),      # weights resident
            pl.BlockSpec(w2b.shape, lambda i: (0, 0)),
            pl.BlockSpec(w3b.shape, lambda i: (0, 0)),
            pl.BlockSpec(b_all.shape, lambda i: (0, 0)),    # folded biases
        ],
        out_specs=pl.BlockSpec((tb, LANE), lambda i: (i, 0)),
        compiler_params=pltpu.CompilerParams(dimension_semantics=(sem,)),
    )(xp, w1b, w2b, w3b, b_all)

    # Module semantics require (B, num_classes); consumers that accept the
    # padded (b_pad, 128) block can skip this slice to save a pass.
    return out[:B, :num_classes]


def init_params(key, input_size, num_classes):
    """Deterministic init mirroring nn.Linear's U(-1/sqrt(fan_in), 1/sqrt(fan_in))."""
    dims = [(input_size, 128), (128, 64), (64, num_classes)]
    params = []
    for (fan_in, fan_out) in dims:
        key, kw, kb = jax.random.split(key, 3)
        bound = 1.0 / jnp.sqrt(jnp.float32(fan_in))
        w = jax.random.uniform(kw, (fan_in, fan_out), jnp.float32, -bound, bound)
        b = jax.random.uniform(kb, (1, fan_out), jnp.float32, -bound, bound)
        params += [w, b]
    return tuple(params)


if __name__ == "__main__":
    input_size = 32
    num_classes = 10
    batch = 256          # -> 2 tiles of 128 (exercises the batch-tiled grid)

    key = jax.random.PRNGKey(0)
    key, kx = jax.random.split(key)
    x = jax.random.normal(kx, (batch, input_size), jnp.float32)
    params = init_params(key, input_size, num_classes)

    # Hoisted, call-once parameter preprocessing.
    prepared = jax.tree_util.tree_map(jax.block_until_ready,
                                      prepare_params(params))

    fwd = functools.partial(simple_mlp_forward, num_classes=num_classes)
    out = jax.block_until_ready(fwd(x, prepared))           # bf16 logits
    assert out.shape == (batch, num_classes)

    # Reference 1: same bf16-operand / f32-accumulation math in pure JAX
    # (loose-ish tolerance for the final bf16 output cast).
    w1, b1, w2, b2, w3, b3 = params
    xb = x.astype(jnp.bfloat16)
    w1b, w2b, w3b = (w.astype(jnp.bfloat16) for w in (w1, w2, w3))
    ref = jnp.maximum(
        jnp.dot(xb, w1b, preferred_element_type=jnp.float32) + b1, 0.0)
    ref = jnp.maximum(
        jnp.dot(ref.astype(jnp.bfloat16), w2b,
                preferred_element_type=jnp.float32) + b2, 0.0)
    ref = jnp.dot(ref.astype(jnp.bfloat16), w3b,
                  preferred_element_type=jnp.float32) + b3
    assert jnp.allclose(out.astype(jnp.float32), ref, atol=5e-2, rtol=5e-2)

    # Reference 2: full-f32 math (loose tolerance: bf16 operands + bf16 output).
    ref32 = jnp.maximum(x @ w1 + b1, 0.0)
    ref32 = jnp.maximum(ref32 @ w2 + b2, 0.0)
    ref32 = ref32 @ w3 + b3
    assert jnp.allclose(out.astype(jnp.float32), ref32, atol=2e-1, rtol=2e-1)

    # f32-output path (full module-dtype fidelity) also works.
    out32 = jax.block_until_ready(fwd(x, prepared, out_dtype=jnp.float32))
    assert jnp.allclose(out32, ref, atol=1e-3, rtol=1e-3)

    print("KERNEL_OK")
</pallas_src>

<mosaic_0001>
module attributes {stable_mosaic.version = 11 : i64} {
  func.func @mlp_kernel(%arg0: i32, %arg1: memref<128x32xf32, #tpu.memory_space<vmem>>, %arg2: memref<32x128xbf16, #tpu.memory_space<vmem>>, %arg3: memref<128x128xbf16, #tpu.memory_space<vmem>>, %arg4: memref<128x128xbf16, #tpu.memory_space<vmem>>, %arg5: memref<3x128xf32, #tpu.memory_space<vmem>>, %arg6: memref<128x128xbf16, #tpu.memory_space<vmem>>) attributes {dimension_semantics = [#tpu.dimension_semantics<parallel>], iteration_bounds = array<i64: 2>, scalar_prefetch = 0 : i64, scratch_operands = 0 : i64, tpu.core_type = #tpu.core_type<tc>, window_params = [{transform_indices = @transform_0, window_bounds = array<i64: 128, 32>}, {pipeline_mode = #tpu.pipeline_mode<synchronous>, transform_indices = @transform_1, window_bounds = array<i64: 32, 128>}, {pipeline_mode = #tpu.pipeline_mode<synchronous>, transform_indices = @transform_2, window_bounds = array<i64: 128, 128>}, {pipeline_mode = #tpu.pipeline_mode<synchronous>, transform_indices = @transform_3, window_bounds = array<i64: 128, 128>}, {pipeline_mode = #tpu.pipeline_mode<synchronous>, transform_indices = @transform_4, window_bounds = array<i64: 3, 128>}, {transform_indices = @transform_5, window_bounds = array<i64: 128, 128>}]} {
    %c0 = arith.constant 0 : index
    %c0_0 = arith.constant 0 : index
    %0 = vector.load %arg1[%c0, %c0_0] : memref<128x32xf32, #tpu.memory_space<vmem>>, vector<128x32xf32>
    %1 = arith.truncf %0 : vector<128x32xf32> to vector<128x32xbf16>
    %c0_1 = arith.constant 0 : index
    %c0_2 = arith.constant 0 : index
    %2 = vector.load %arg2[%c0_1, %c0_2] : memref<32x128xbf16, #tpu.memory_space<vmem>>, vector<32x128xbf16>
    %cst = arith.constant dense<0.000000e+00> : vector<128x128xf32>
    %3 = tpu.matmul %1, %2, %cst {dimension_numbers = #tpu.dot_dimension_numbers<[1], [0], [0], [1], [0, 0, 1, 1], [], []>} : vector<128x32xbf16>, vector<32x128xbf16>, vector<128x128xf32> -> vector<128x128xf32>
    %c0_3 = arith.constant 0 : index
    %c0_4 = arith.constant 0 : index
    %4 = vector.load %arg5[%c0_3, %c0_4] : memref<3x128xf32, #tpu.memory_space<vmem>>, vector<1x128xf32>
    %5 = vector.broadcast %4 : vector<1x128xf32> to vector<128x128xf32>
    %6 = arith.addf %3, %5 : vector<128x128xf32>
    %cst_5 = arith.constant 0.000000e+00 : f32
    %7 = vector.broadcast %cst_5 : f32 to vector<128x128xf32>
    %8 = arith.maximumf %6, %7 : vector<128x128xf32>
    %9 = arith.truncf %8 : vector<128x128xf32> to vector<128x128xbf16>
    %c0_6 = arith.constant 0 : index
    %c0_7 = arith.constant 0 : index
    %10 = vector.load %arg3[%c0_6, %c0_7] : memref<128x128xbf16, #tpu.memory_space<vmem>>, vector<128x128xbf16>
    %cst_8 = arith.constant dense<0.000000e+00> : vector<128x128xf32>
    %11 = tpu.matmul %9, %10, %cst_8 {dimension_numbers = #tpu.dot_dimension_numbers<[1], [0], [0], [1], [0, 0, 1, 1], [], []>} : vector<128x128xbf16>, vector<128x128xbf16>, vector<128x128xf32> -> vector<128x128xf32>
    %c1 = arith.constant 1 : index
    %c0_9 = arith.constant 0 : index
    %12 = vector.load %arg5[%c1, %c0_9] : memref<3x128xf32, #tpu.memory_space<vmem>>, vector<1x128xf32>
    %13 = vector.broadcast %12 : vector<1x128xf32> to vector<128x128xf32>
    %14 = arith.addf %11, %13 : vector<128x128xf32>
    %cst_10 = arith.constant 0.000000e+00 : f32
    %15 = vector.broadcast %cst_10 : f32 to vector<128x128xf32>
    %16 = arith.maximumf %14, %15 : vector<128x128xf32>
    %17 = arith.truncf %16 : vector<128x128xf32> to vector<128x128xbf16>
    %c0_11 = arith.constant 0 : index
    %c0_12 = arith.constant 0 : index
    %18 = vector.load %arg4[%c0_11, %c0_12] : memref<128x128xbf16, #tpu.memory_space<vmem>>, vector<128x128xbf16>
    %cst_13 = arith.constant dense<0.000000e+00> : vector<128x128xf32>
    %19 = tpu.matmul %17, %18, %cst_13 {dimension_numbers = #tpu.dot_dimension_numbers<[1], [0], [0], [1], [0, 0, 1, 1], [], []>} : vector<128x128xbf16>, vector<128x128xbf16>, vector<128x128xf32> -> vector<128x128xf32>
    %c2 = arith.constant 2 : index
    %c0_14 = arith.constant 0 : index
    %20 = vector.load %arg5[%c2, %c0_14] : memref<3x128xf32, #tpu.memory_space<vmem>>, vector<1x128xf32>
    %21 = vector.broadcast %20 : vector<1x128xf32> to vector<128x128xf32>
    %22 = arith.addf %19, %21 : vector<128x128xf32>
    %23 = arith.truncf %22 : vector<128x128xf32> to vector<128x128xbf16>
    %c0_15 = arith.constant 0 : index
    %c0_16 = arith.constant 0 : index
    %24 = vector.load %arg6[%c0_15, %c0_16] : memref<128x128xbf16, #tpu.memory_space<vmem>>, vector<128x128xbf16>
    tpu.vector_store %arg6[%c0_15, %c0_16], %23 {strides = array<i32>} : memref<128x128xbf16, #tpu.memory_space<vmem>>, vector<128x128xbf16>,
    return
  }
  func.func @transform_0(%arg0: i32) -> (i32, i32) {
    %c0_i32 = arith.constant 0 : i32
    %c0_i32_0 = arith.constant 0 : i32
    return %arg0, %c0_i32 : i32, i32
  }
  func.func @transform_1(%arg0: i32) -> (i32, i32) {
    %c0_i32 = arith.constant 0 : i32
    %c0_i32_0 = arith.constant 0 : i32
    %c0_i32_1 = arith.constant 0 : i32
    return %c0_i32, %c0_i32_0 : i32, i32
  }
  func.func @transform_2(%arg0: i32) -> (i32, i32) {
    %c0_i32 = arith.constant 0 : i32
    %c0_i32_0 = arith.constant 0 : i32
    %c0_i32_1 = arith.constant 0 : i32
    return %c0_i32, %c0_i32_0 : i32, i32
  }
  func.func @transform_3(%arg0: i32) -> (i32, i32) {
    %c0_i32 = arith.constant 0 : i32
    %c0_i32_0 = arith.constant 0 : i32
    %c0_i32_1 = arith.constant 0 : i32
    return %c0_i32, %c0_i32_0 : i32, i32
  }
  func.func @transform_4(%arg0: i32) -> (i32, i32) {
    %c0_i32 = arith.constant 0 : i32
    %c0_i32_0 = arith.constant 0 : i32
    %c0_i32_1 = arith.constant 0 : i32
    return %c0_i32, %c0_i32_0 : i32, i32
  }
  func.func @transform_5(%arg0: i32) -> (i32, i32) {
    %c0_i32 = arith.constant 0 : i32
    %c0_i32_0 = arith.constant 0 : i32
    return %arg0, %c0_i32 : i32, i32
  }
}

</mosaic_0001>

<llo_original>
// kernel: tpu_custom_call.1
$region0: #{tpu_custom_call.1}
  #allocation0 [shape = 'u32[]', space=smem, size = 0x4, offset = 0x4, fixed_abs, tag = 'smem constant byte address 0x4 - core index']
  #allocation1 [shape = 'u32[144,128]{1,0:T(1,128)}', space=vmem, size = 0x12000, scoped, tag = 'internal scratch']
  %s0 = inlined_call_operand.vmem [shape: f32[256,32], index: 0, kind: input, shape index: {}]
  %s1 = inlined_call_operand.vmem [shape: bf16[32,128], index: 1, kind: input, shape index: {}]
  %s2 = inlined_call_operand.vmem [shape: bf16[128,128], index: 2, kind: input, shape index: {}]
  %s3 = inlined_call_operand.vmem [shape: bf16[128,128], index: 3, kind: input, shape index: {}]
  %s4 = inlined_call_operand.vmem [shape: f32[3,128], index: 4, kind: input, shape index: {}]
  %s5 = inlined_call_operand.hbm [shape: bf16[256,128], index: 5, kind: output, shape index: {}]
  %s6 = sld [smem:[#allocation0]]
  $region53: #{tpu_custom_call.1} parent=0
    _
  %s8 = ssub.s32 1, %s6
  %s9 = scalar_select 0, %s8, %s6
  $region1: #{tpu_custom_call.1} parent=0
    #allocation2 [shape = 'u8[65536]{0}', space=vmem, size = 0x10000, scoped, tag = 'output window, operand 0']
    #allocation3 [shape = 's32[2]{0}', space=sflag, size = 0x8, scoped, tag = 'scoped memory for tpu_custom_call.1']
    %10 = vsyncpa [#allocation3], 0
    %s11 = scalar_lea.sflag [#allocation3], 1
    %12 = vsyncpa %s11, 0
    loop: start=0, step=1, limit=4
    $region2: #{tpu_custom_call.1} parent=1 // loop_pre_header
      _
    $region3: #{tpu_custom_call.1} parent=1 // loop_header
      %s14 = sphi 0, %s18
      %p15 = scmp.ge.s32.totalorder %s14, 4
      %s24 = sphi 0, %s26
      %s27 = sphi 0, %s24
      %s28 = sphi 0, %s27
      %s44 = sphi 0, %s28
      %s48 = sphi 0, %s48
      %s50 = sphi 0, %s48
      %s51 = sphi 0, %s50
      %s65 = sphi 0, %s51
      %s69 = sphi 0, %s69
      %s71 = sphi 0, %s69
      %s72 = sphi 0, %s71
      %s86 = sphi 0, %s72
      %s90 = sphi 0, %s90
      %s92 = sphi 0, %s90
      %s93 = sphi 0, %s92
      %s107 = sphi 0, %s93
      %s111 = sphi 0, %s111
      %s113 = sphi 0, %s111
      %s114 = sphi 0, %s113
      %s128 = sphi 0, %s114
      %s134 = sphi 0, %s136
      %s137 = sphi 0, %s134
      %s138 = sphi 0, %s137
      %s154 = sphi 0, %s138
    $region4: #{tpu_custom_call.1} parent=1 // loop_header_branch
      %17 = sbr.rel (%p15) target = $region8
    $region5: #{tpu_custom_call.1} parent=1 // loop_body
      %s19 = ssub.s32 %s14, 1
      %s20 = ssub.s32 %s14, 2
      %s21 = sadd.s32 %s14, 1
      %s22 = ssub.s32 %s14, %s21
      %p23 = scmp.eq.s32.totalorder %s22, 0
      %s25 = sadd.s32 %s24, 1
      %s26 = scalar_select %p23, %s24, %s25
      %p29 = pneg %p23
      %p30 = scmp.eq.s32.totalorder %s14, 1
      %p31 = por %p29, %p30
      %p32 = scmp.ne.s32.totalorder %s24, %s27
      %p33 = scmp.eq.s32.totalorder %s14, 0
      %p34 = por %p32, %p33
      %p35 = scmp.ne.s32.totalorder %s24, %s27
      %p36 = scmp.eq.s32.totalorder %s19, 1
      %p37 = por %p35, %p36
      %p38 = scmp.ne.s32.totalorder %s27, %s28
      %p39 = scmp.eq.s32.totalorder %s19, 0
      %p40 = por %p38, %p39
      %p41 = scmp.ne.s32.totalorder %s27, %s28
      %p42 = scmp.eq.s32.totalorder %s20, 1
      %p43 = por %p41, %p42
      %p45 = scmp.ne.s32.totalorder %s28, %s44
      %p46 = scmp.eq.s32.totalorder %s20, 0
      %p47 = por %p45, %p46
      %s49 = sadd.s32 %s48, 1
      %p52 = scmp.eq.s32.totalorder %s14, 1
      %p53 = scmp.ne.s32.totalorder %s48, %s50
      %p54 = scmp.eq.s32.totalorder %s14, 0
      %p55 = por %p53, %p54
      %p56 = scmp.ne.s32.totalorder %s48, %s50
      %p57 = scmp.eq.s32.totalorder %s19, 1
      %p58 = por %p56, %p57
      %p59 = scmp.ne.s32.totalorder %s50, %s51
      %p60 = scmp.eq.s32.totalorder %s19, 0
      %p61 = por %p59, %p60
      %p62 = scmp.ne.s32.totalorder %s50, %s51
      %p63 = scmp.eq.s32.totalorder %s20, 1
      %p64 = por %p62, %p63
      %p66 = scmp.ne.s32.totalorder %s51, %s65
      %p67 = scmp.eq.s32.totalorder %s20, 0
      %p68 = por %p66, %p67
      %s70 = sadd.s32 %s69, 1
      %p73 = scmp.eq.s32.totalorder %s14, 1
      %p74 = scmp.ne.s32.totalorder %s69, %s71
      %p75 = scmp.eq.s32.totalorder %s14, 0
      %p76 = por %p74, %p75
      %p77 = scmp.ne.s32.totalorder %s69, %s71
      %p78 = scmp.eq.s32.totalorder %s19, 1
      %p79 = por %p77, %p78
      %p80 = scmp.ne.s32.totalorder %s71, %s72
      %p81 = scmp.eq.s32.totalorder %s19, 0
      %p82 = por %p80, %p81
      %p83 = scmp.ne.s32.totalorder %s71, %s72
      %p84 = scmp.eq.s32.totalorder %s20, 1
      %p85 = por %p83, %p84
      %p87 = scmp.ne.s32.totalorder %s72, %s86
      %p88 = scmp.eq.s32.totalorder %s20, 0
      %p89 = por %p87, %p88
      %s91 = sadd.s32 %s90, 1
      %p94 = scmp.eq.s32.totalorder %s14, 1
      %p95 = scmp.ne.s32.totalorder %s90, %s92
      %p96 = scmp.eq.s32.totalorder %s14, 0
      %p97 = por %p95, %p96
      %p98 = scmp.ne.s32.totalorder %s90, %s92
      %p99 = scmp.eq.s32.totalorder %s19, 1
      %p100 = por %p98, %p99
      %p101 = scmp.ne.s32.totalorder %s92, %s93
      %p102 = scmp.eq.s32.totalorder %s19, 0
      %p103 = por %p101, %p102
      %p104 = scmp.ne.s32.totalorder %s92, %s93
      %p105 = scmp.eq.s32.totalorder %s20, 1
      %p106 = por %p104, %p105
      %p108 = scmp.ne.s32.totalorder %s93, %s107
      %p109 = scmp.eq.s32.totalorder %s20, 0
      %p110 = por %p108, %p109
      %s112 = sadd.s32 %s111, 1
      %p115 = scmp.eq.s32.totalorder %s14, 1
      %p116 = scmp.ne.s32.totalorder %s111, %s113
      %p117 = scmp.eq.s32.totalorder %s14, 0
      %p118 = por %p116, %p117
      %p119 = scmp.ne.s32.totalorder %s111, %s113
      %p120 = scmp.eq.s32.totalorder %s19, 1
      %p121 = por %p119, %p120
      %p122 = scmp.ne.s32.totalorder %s113, %s114
      %p123 = scmp.eq.s32.totalorder %s19, 0
      %p124 = por %p122, %p123
      %p125 = scmp.ne.s32.totalorder %s113, %s114
      %p126 = scmp.eq.s32.totalorder %s20, 1
      %p127 = por %p125, %p126
      %p129 = scmp.ne.s32.totalorder %s114, %s128
      %p130 = scmp.eq.s32.totalorder %s20, 0
      %p131 = por %p129, %p130
      %s132 = ssub.s32 %s14, %s21
      %p133 = scmp.eq.s32.totalorder %s132, 0
      %s135 = sadd.s32 %s134, 1
      %s136 = scalar_select %p133, %s134, %s135
      %p139 = pneg %p133
      %p140 = scmp.eq.s32.totalorder %s14, 1
      %p141 = por %p139, %p140
      %p142 = scmp.ne.s32.totalorder %s134, %s137
      %p143 = scmp.eq.s32.totalorder %s14, 0
      %p144 = por %p142, %p143
      %p145 = scmp.ne.s32.totalorder %s134, %s137
      %p146 = scmp.eq.s32.totalorder %s19, 1
      %p147 = por %p145, %p146
      %p148 = scmp.ne.s32.totalorder %s137, %s138
      %p149 = scmp.eq.s32.totalorder %s19, 0
      %p150 = por %p148, %p149
      %p151 = scmp.ne.s32.totalorder %s137, %s138
      %p152 = scmp.eq.s32.totalorder %s20, 1
      %p153 = por %p151, %p152
      %p155 = scmp.ne.s32.totalorder %s138, %s154
      %p156 = scmp.eq.s32.totalorder %s20, 0
      %p157 = por %p155, %p156
      %p158 = scmp.le.s32.totalorder 1, %s14
      %p159 = scmp.lt.s32.totalorder %s14, 3
      %p160 = pnand %p158, %p159
      %p161 = pneg %p160
      // Predicated region
      $region9: #{tpu_custom_call.1} parent=5 // pred_check
        _
      $region10: #{tpu_custom_call.1} parent=5 // pred_check_branch
        %163 = sbr.rel (%p160) target = $region12
      $region11: #{tpu_custom_call.1} parent=5 // pred_region
        %s164 = ssub.s32 %s14, 1
        // Predicated region
        $region13: #{tpu_custom_call.1} parent=11 // pred_check
          %p165 = pneg %p61
        $region14: #{tpu_custom_call.1} parent=11 // pred_check_branch
          %167 = sbr.rel (%p165) target = $region16
        $region15: #{tpu_custom_call.1} parent=11 // pred_region
          _
        $region16: #{tpu_custom_call.1} parent=11 // pred_fallthru
          _
        // Predicated region
        $region17: #{tpu_custom_call.1} parent=11 // pred_check
          %p168 = pneg %p82
        $region18: #{tpu_custom_call.1} parent=11 // pred_check_branch
          %170 = sbr.rel (%p168) target = $region20
        $region19: #{tpu_custom_call.1} parent=11 // pred_region
          _
        $region20: #{tpu_custom_call.1} parent=11 // pred_fallthru
          _
        // Predicated region
        $region21: #{tpu_custom_call.1} parent=11 // pred_check
          %p171 = pneg %p103
        $region22: #{tpu_custom_call.1} parent=11 // pred_check_branch
          %173 = sbr.rel (%p171) target = $region24
        $region23: #{tpu_custom_call.1} parent=11 // pred_region
          _
        $region24: #{tpu_custom_call.1} parent=11 // pred_fallthru
          _
        // Predicated region
        $region25: #{tpu_custom_call.1} parent=11 // pred_check
          %p174 = pneg %p124
        $region26: #{tpu_custom_call.1} parent=11 // pred_check_branch
          %176 = sbr.rel (%p174) target = $region28
        $region27: #{tpu_custom_call.1} parent=11 // pred_region
          _
        $region28: #{tpu_custom_call.1} parent=11 // pred_fallthru
          _
      $region12: #{tpu_custom_call.1} parent=5 // pred_fallthru
        _
      %p177 = scmp.lt.s32.totalorder %s14, 2
      // Predicated region
      $region29: #{tpu_custom_call.1} parent=5 // pred_check
        %p178 = pneg %p177
      $region30: #{tpu_custom_call.1} parent=5 // pred_check_branch
        %180 = sbr.rel (%p178) target = $region32
      $region31: #{tpu_custom_call.1} parent=5 // pred_region
        // Predicated region
        $region33: #{tpu_custom_call.1} parent=31 // pred_check
          %p181 = pneg %p34
        $region34: #{tpu_custom_call.1} parent=31 // pred_check_branch
          %183 = sbr.rel (%p181) target = $region36
        $region35: #{tpu_custom_call.1} parent=31 // pred_region
          %s184 = smul.u32 16, %s14
          %p185 = scmp.lt.s32.totalorder %s184, 31
          %s186 = scalar_select %p185, %s184, 31
          %s187 = smul.addr %s186, 8
          %s188 = scalar_lea.vmem %s0, %s187
          %s189 = smul.u32 16, %s14
        $region36: #{tpu_custom_call.1} parent=31 // pred_fallthru
          _
      $region32: #{tpu_custom_call.1} parent=5 // pred_fallthru
        _
      %p190 = scmp.le.s32.totalorder 1, %s14
      %p191 = scmp.lt.s32.totalorder %s14, 3
      %p192 = pnand %p190, %p191
      %p193 = pneg %p192
      // Predicated region
      $region37: #{tpu_custom_call.1} parent=5 // pred_check
        _
      $region38: #{tpu_custom_call.1} parent=5 // pred_check_branch
        %195 = sbr.rel (%p192) target = $region40
      $region39: #{tpu_custom_call.1} parent=5 // pred_region
        %s196 = ssub.s32 %s14, 1
        %s197 = smul.u32 16, %s19
        %p198 = scmp.lt.s32.totalorder %s197, 31
        %s199 = scalar_select %p198, %s197, 31
        %s200 = smul.addr %s199, 8
        %s201 = scalar_lea.vmem %s0, %s200
        %p202 = pneg %p40
        %p203 = pneg %p37
        %p204 = pneg %p61
        %p205 = pneg %p58
        %p206 = pneg %p82
        %p207 = pneg %p79
        %p208 = pneg %p103
        %p209 = pneg %p100
        %p210 = pneg %p124
        %p211 = pneg %p121
        %p212 = pneg %p150
        %p213 = pneg %p147
        %s214 = sand.u32 %s137, 1
        %s215 = scalar_lea.sflag [#allocation3], %s214
        %s216 = sand.u32 %s137, 1
        %s217 = smul.addr %s216, 64
        %s218 = scalar_lea.vmem [#allocation2], %s217
        %s219 = smul.u32 16, %s19
        %p220 = scmp.lt.s32.totalorder %s219, 31
        %s221 = scalar_select %p220, %s219, 31
        %s222 = smul.addr %s221, 8
        %s223 = scalar_lea.vmem %s0, %s222
        %s224 = smul.u32 16, %s19
        %s225 = smul.u32 16, %s19
        %v227 = vld [vmem:[%s223] sm:$0xff]
        %v228 = vld [vmem:[%s223 + $0x8] sm:$0xff]
        %v229 = vld [vmem:[%s223 + $0x10] sm:$0xff]
        %v230 = vld [vmem:[%s223 + $0x18] sm:$0xff]
        %v231 = vld [vmem:[%s223 + $0x20] sm:$0xff]
        %v232 = vld [vmem:[%s223 + $0x28] sm:$0xff]
        %v233 = vld [vmem:[%s223 + $0x30] sm:$0xff]
        %v234 = vld [vmem:[%s223 + $0x38] sm:$0xff]
        %v235 = vld [vmem:[%s223 + $0x40] sm:$0xff]
        %v236 = vld [vmem:[%s223 + $0x48] sm:$0xff]
        %v237 = vld [vmem:[%s223 + $0x50] sm:$0xff]
        %v238 = vld [vmem:[%s223 + $0x58] sm:$0xff]
        %v239 = vld [vmem:[%s223 + $0x60] sm:$0xff]
        %v240 = vld [vmem:[%s223 + $0x68] sm:$0xff]
        %v241 = vld [vmem:[%s223 + $0x70] sm:$0xff]
        %v242 = vld [vmem:[%s223 + $0x78] sm:$0xff]
        %v243 = vpack.c.bf16 %v228, %v227
        %v244 = vpack.c.bf16 %v230, %v229
        %v245 = vpack.c.bf16 %v232, %v231
        %v246 = vpack.c.bf16 %v234, %v233
        %v247 = vpack.c.bf16 %v236, %v235
        %v248 = vpack.c.bf16 %v238, %v237
        %v249 = vpack.c.bf16 %v240, %v239
        %v250 = vpack.c.bf16 %v242, %v241
        %v251 = vld [vmem:[%s1] sm:$0xf]
        %v252 = vld [vmem:[%s1 + $0x4] sm:$0xf]
        %v253 = vld [vmem:[%s1 + $0x8] sm:$0xf]
        %v254 = vld [vmem:[%s1 + $0xc] sm:$0xf]
        %v255 = vld [vmem:[%s4] sm:$0x1]
        %v256 = vlaneseq
        %v257 = vshrl.u32 %v256, 7
        %v258 = vsub.s32 0, %v257
        %v259 = vrot.slane %v255, %v258
        %v264 = vunpack.c.l.b16 %v251
        %v265 = vunpack.c.l.b16 %v252
        %v266 = vunpack.c.l.b16 %v253
        %v267 = vunpack.c.l.b16 %v254
        %v268 = vpack.c.b16 %v265, %v264
        %v269 = vpack.c.b16 %v267, %v266
        %vm272 = vcmask 261120
        %v274 = vsel %vm272, %v243, 0
        %v277 = vsel %vm272, %v244, 0
        %v280 = vsel %vm272, %v245, 0
        %v283 = vsel %vm272, %v246, 0
        %v286 = vsel %vm272, %v247, 0
        %v289 = vsel %vm272, %v248, 0
        %v292 = vsel %vm272, %v249, 0
        %v295 = vsel %vm272, %v250, 0
        %297 = vmatprep.subr.bf16.mxu0 0
        %298 = vmatpush1.bf16.msra.mxu0 %v268
        %299 = vmatprep.subr.bf16.mxu0 0
        %300 = vmatpush1.bf16.msra.mxu0 %v269
        %301 = vmatprep.subr.bf16.mxu0 0
        %302 = vmatpush1.bf16.msra.mxu0 0
        %303 = vmatprep.subr.bf16.mxu0 0
        %304 = vmatpush1.bf16.msra.mxu0 0
        %305 = vmatprep.subr.bf16.mxu0 0
        %306 = vmatpush1.bf16.msra.mxu0 0
        %307 = vmatprep.subr.bf16.mxu0 0
        %308 = vmatpush1.bf16.msra.mxu0 0
        %309 = vmatprep.subr.bf16.mxu0 0
        %310 = vmatpush1.bf16.msra.mxu0 0
        %311 = vmatprep.subr.bf16.mxu0 0
        %312 = vmatpush1.bf16.msra.mxu0 0
        %313 = vmatprep.subr.bf16.mxu0 0
        %314 = vmatpush1.bf16.msra.mxu0 0
        %315 = vmatprep.subr.bf16.mxu0 0
        %316 = vmatpush1.bf16.msra.mxu0 0
        %317 = vmatprep.subr.bf16.mxu0 0
        %318 = vmatpush1.bf16.msra.mxu0 0
        %319 = vmatprep.subr.bf16.mxu0 0
        %320 = vmatpush1.bf16.msra.mxu0 0
        %321 = vmatprep.subr.bf16.mxu0 0
        %322 = vmatpush1.bf16.msra.mxu0 0
        %323 = vmatprep.subr.bf16.mxu0 0
        %324 = vmatpush1.bf16.msra.mxu0 0
        %325 = vmatprep.subr.bf16.mxu0 0
        %326 = vmatpush1.bf16.msra.mxu0 0
        %327 = vmatprep.subr.bf16.mxu0 0
        %328 = vmatpush1.bf16.msra.mxu0 0
        %329 = vmatprep.mubr.bf16.mxu0 0
        %330 = vmatmul.mubr.bf16.gmra.mrb[0].mxu0 %v274
        %v331 = vpop.f32.mrb[0].mxu0
        %v332 = vadd.f32 %v259, %v331
        %v333 = vpop.f32.mrb[0].mxu0
        %v334 = vpop.f32.mrb[0].mxu0
        %v335 = vadd.f32 %v259, %v334
        %v336 = vpop.f32.mrb[0].mxu0
        %337 = vmatprep.mubr.bf16.mxu0 0
        %338 = vmatmul.mubr.bf16.gmra.mrb[0].mxu0 %v277
        %v339 = vpop.f32.mrb[0].mxu0
        %v340 = vadd.f32 %v259, %v339
        %v341 = vpop.f32.mrb[0].mxu0
        %v342 = vpop.f32.mrb[0].mxu0
        %v343 = vadd.f32 %v259, %v342
        %v344 = vpop.f32.mrb[0].mxu0
        %345 = vmatprep.mubr.bf16.mxu0 0
        %346 = vmatmul.mubr.bf16.gmra.mrb[0].mxu0 %v280
        %v347 = vpop.f32.mrb[0].mxu0
        %v348 = vadd.f32 %v259, %v347
        %v349 = vpop.f32.mrb[0].mxu0
        %v350 = vpop.f32.mrb[0].mxu0
        %v351 = vadd.f32 %v259, %v350
        %v352 = vpop.f32.mrb[0].mxu0
        %353 = vmatprep.mubr.bf16.mxu0 0
        %354 = vmatmul.mubr.bf16.gmra.mrb[0].mxu0 %v283
        %v355 = vpop.f32.mrb[0].mxu0
        %v356 = vadd.f32 %v259, %v355
        %v357 = vpop.f32.mrb[0].mxu0
        %v358 = vpop.f32.mrb[0].mxu0
        %v359 = vadd.f32 %v259, %v358
        %v360 = vpop.f32.mrb[0].mxu0
        %361 = vmatprep.mubr.bf16.mxu0 0
        %362 = vmatmul.mubr.bf16.gmra.mrb[0].mxu0 %v286
        %v363 = vpop.f32.mrb[0].mxu0
        %v364 = vadd.f32 %v259, %v363
        %v365 = vpop.f32.mrb[0].mxu0
        %v366 = vpop.f32.mrb[0].mxu0
        %v367 = vadd.f32 %v259, %v366
        %v368 = vpop.f32.mrb[0].mxu0
        %369 = vmatprep.mubr.bf16.mxu0 0
        %370 = vmatmul.mubr.bf16.gmra.mrb[0].mxu0 %v289
        %v371 = vpop.f32.mrb[0].mxu0
        %v372 = vadd.f32 %v259, %v371
        %v373 = vpop.f32.mrb[0].mxu0
        %v374 = vpop.f32.mrb[0].mxu0
        %v375 = vadd.f32 %v259, %v374
        %v376 = vpop.f32.mrb[0].mxu0
        %377 = vmatprep.mubr.bf16.mxu0 0
        %378 = vmatmul.mubr.bf16.gmra.mrb[0].mxu0 %v292
        %v379 = vpop.f32.mrb[0].mxu0
        %v380 = vadd.f32 %v259, %v379
        %v381 = vpop.f32.mrb[0].mxu0
        %v382 = vpop.f32.mrb[0].mxu0
        %v383 = vadd.f32 %v259, %v382
        %v384 = vpop.f32.mrb[0].mxu0
        %385 = vmatprep.mubr.bf16.mxu0 0
        %386 = vmatmul.mubr.bf16.gmra.mrb[0].mxu0 %v295
        %v387 = vpop.f32.mrb[0].mxu0
        %v388 = vadd.f32 %v259, %v387
        %v389 = vpop.f32.mrb[0].mxu0
        %v390 = vpop.f32.mrb[0].mxu0
        %v391 = vadd.f32 %v259, %v390
        %v392 = vpop.f32.mrb[0].mxu0
        %393 = vdwg.mxu0
        %v394 = vmax.f32 %v332, 0.0
        %v395 = vmax.f32 %v335, 0.0
        %v396 = vmax.f32 %v340, 0.0
        %v397 = vmax.f32 %v343, 0.0
        %v398 = vmax.f32 %v348, 0.0
        %v399 = vmax.f32 %v351, 0.0
        %v400 = vmax.f32 %v356, 0.0
        %v401 = vmax.f32 %v359, 0.0
        %v402 = vmax.f32 %v364, 0.0
        %v403 = vmax.f32 %v367, 0.0
        %v404 = vmax.f32 %v372, 0.0
        %v405 = vmax.f32 %v375, 0.0
        %v406 = vmax.f32 %v380, 0.0
        %v407 = vmax.f32 %v383, 0.0
        %v408 = vmax.f32 %v388, 0.0
        %v409 = vmax.f32 %v391, 0.0
        %v410 = vpack.c.bf16 %v395, %v394
        %v411 = vpack.c.bf16 %v397, %v396
        %v412 = vpack.c.bf16 %v399, %v398
        %v413 = vpack.c.bf16 %v401, %v400
        %v414 = vpack.c.bf16 %v403, %v402
        %v415 = vpack.c.bf16 %v405, %v404
        %v416 = vpack.c.bf16 %v407, %v406
        %v417 = vpack.c.bf16 %v409, %v408
        %v418 = vld [vmem:[%s2] sm:$0xf]
        %v419 = vld [vmem:[%s2 + $0x4] sm:$0xf]
        %v420 = vld [vmem:[%s2 + $0x8] sm:$0xf]
        %v421 = vld [vmem:[%s2 + $0xc] sm:$0xf]
        %v422 = vld [vmem:[%s2 + $0x10] sm:$0xf]
        %v423 = vld [vmem:[%s2 + $0x14] sm:$0xf]
        %v424 = vld [vmem:[%s2 + $0x18] sm:$0xf]
        %v425 = vld [vmem:[%s2 + $0x1c] sm:$0xf]
        %v426 = vld [vmem:[%s2 + $0x20] sm:$0xf]
        %v427 = vld [vmem:[%s2 + $0x24] sm:$0xf]
        %v428 = vld [vmem:[%s2 + $0x28] sm:$0xf]
        %v429 = vld [vmem:[%s2 + $0x2c] sm:$0xf]
        %v430 = vld [vmem:[%s2 + $0x30] sm:$0xf]
        %v431 = vld [vmem:[%s2 + $0x34] sm:$0xf]
        %v432 = vld [vmem:[%s2 + $0x38] sm:$0xf]
        %v433 = vld [vmem:[%s2 + $0x3c] sm:$0xf]
        %v434 = vld [vmem:[%s4 + $0x1] sm:$0x1]
        %v435 = vlaneseq
        %v436 = vshrl.u32 %v435, 7
        %v437 = vsub.s32 0, %v436
        %v438 = vrot.slane %v434, %v437
        %v455 = vunpack.c.l.b16 %v418
        %v456 = vunpack.c.l.b16 %v419
        %v457 = vunpack.c.l.b16 %v420
        %v458 = vunpack.c.l.b16 %v421
        %v459 = vunpack.c.l.b16 %v422
        %v460 = vunpack.c.l.b16 %v423
        %v461 = vunpack.c.l.b16 %v424
        %v462 = vunpack.c.l.b16 %v425
        %v463 = vunpack.c.l.b16 %v426
        %v464 = vunpack.c.l.b16 %v427
        %v465 = vunpack.c.l.b16 %v428
        %v466 = vunpack.c.l.b16 %v429
        %v467 = vunpack.c.l.b16 %v430
        %v468 = vunpack.c.l.b16 %v431
        %v469 = vunpack.c.l.b16 %v432
        %v470 = vunpack.c.l.b16 %v433
        %v471 = vpack.c.b16 %v456, %v455
        %v472 = vpack.c.b16 %v458, %v457
        %v473 = vpack.c.b16 %v460, %v459
        %v474 = vpack.c.b16 %v462, %v461
        %v475 = vpack.c.b16 %v464, %v463
        %v476 = vpack.c.b16 %v466, %v465
        %v477 = vpack.c.b16 %v468, %v467
        %v478 = vpack.c.b16 %v470, %v469
        %487 = vmatprep.subr.bf16.mxu0 0
        %488 = vmatpush1.bf16.msra.mxu0 %v471
        %489 = vmatprep.subr.bf16.mxu0 0
        %490 = vmatpush1.bf16.msra.mxu0 %v472
        %491 = vmatprep.subr.bf16.mxu0 0
        %492 = vmatpush1.bf16.msra.mxu0 %v473
        %493 = vmatprep.subr.bf16.mxu0 0
        %494 = vmatpush1.bf16.msra.mxu0 %v474
        %495 = vmatprep.subr.bf16.mxu0 0
        %496 = vmatpush1.bf16.msra.mxu0 %v475
        %497 = vmatprep.subr.bf16.mxu0 0
        %498 = vmatpush1.bf16.msra.mxu0 %v476
        %499 = vmatprep.subr.bf16.mxu0 0
        %500 = vmatpush1.bf16.msra.mxu0 %v477
        %501 = vmatprep.subr.bf16.mxu0 0
        %502 = vmatpush1.bf16.msra.mxu0 %v478
        %503 = vmatprep.subr.bf16.mxu0 0
        %504 = vmatpush1.bf16.msra.mxu0 0
        %505 = vmatprep.subr.bf16.mxu0 0
        %506 = vmatpush1.bf16.msra.mxu0 0
        %507 = vmatprep.subr.bf16.mxu0 0
        %508 = vmatpush1.bf16.msra.mxu0 0
        %509 = vmatprep.subr.bf16.mxu0 0
        %510 = vmatpush1.bf16.msra.mxu0 0
        %511 = vmatprep.subr.bf16.mxu0 0
        %512 = vmatpush1.bf16.msra.mxu0 0
        %513 = vmatprep.subr.bf16.mxu0 0
        %514 = vmatpush1.bf16.msra.mxu0 0
        %515 = vmatprep.subr.bf16.mxu0 0
        %516 = vmatpush1.bf16.msra.mxu0 0
        %517 = vmatprep.subr.bf16.mxu0 0
        %518 = vmatpush1.bf16.msra.mxu0 0
        %519 = vmatprep.mubr.bf16.mxu0 0
        %520 = vmatmul.mubr.bf16.gmra.mrb[0].mxu0 %v410
        %v521 = vpop.f32.mrb[0].mxu0
        %v522 = vadd.f32 %v438, %v521
        %v523 = vpop.f32.mrb[0].mxu0
        %v524 = vpop.f32.mrb[0].mxu0
        %v525 = vadd.f32 %v438, %v524
        %v526 = vpop.f32.mrb[0].mxu0
        %527 = vmatprep.mubr.bf16.mxu0 0
        %528 = vmatmul.mubr.bf16.gmra.mrb[0].mxu0 %v411
        %v529 = vpop.f32.mrb[0].mxu0
        %v530 = vadd.f32 %v438, %v529
        %v531 = vpop.f32.mrb[0].mxu0
        %v532 = vpop.f32.mrb[0].mxu0
        %v533 = vadd.f32 %v438, %v532
        %v534 = vpop.f32.mrb[0].mxu0
        %535 = vmatprep.mubr.bf16.mxu0 0
        %536 = vmatmul.mubr.bf16.gmra.mrb[0].mxu0 %v412
        %v537 = vpop.f32.mrb[0].mxu0
        %v538 = vadd.f32 %v438, %v537
        %v539 = vpop.f32.mrb[0].mxu0
        %v540 = vpop.f32.mrb[0].mxu0
        %v541 = vadd.f32 %v438, %v540
        %v542 = vpop.f32.mrb[0].mxu0
        %543 = vmatprep.mubr.bf16.mxu0 0
        %544 = vmatmul.mubr.bf16.gmra.mrb[0].mxu0 %v413
        %v545 = vpop.f32.mrb[0].mxu0
        %v546 = vadd.f32 %v438, %v545
        %v547 = vpop.f32.mrb[0].mxu0
        %v548 = vpop.f32.mrb[0].mxu0
        %v549 = vadd.f32 %v438, %v548
        %v550 = vpop.f32.mrb[0].mxu0
        %551 = vmatprep.mubr.bf16.mxu0 0
        %552 = vmatmul.mubr.bf16.gmra.mrb[0].mxu0 %v414
        %v553 = vpop.f32.mrb[0].mxu0
        %v554 = vadd.f32 %v438, %v553
        %v555 = vpop.f32.mrb[0].mxu0
        %v556 = vpop.f32.mrb[0].mxu0
        %v557 = vadd.f32 %v438, %v556
        %v558 = vpop.f32.mrb[0].mxu0
        %559 = vmatprep.mubr.bf16.mxu0 0
        %560 = vmatmul.mubr.bf16.gmra.mrb[0].mxu0 %v415
        %v561 = vpop.f32.mrb[0].mxu0
        %v562 = vadd.f32 %v438, %v561
        %v563 = vpop.f32.mrb[0].mxu0
        %v564 = vpop.f32.mrb[0].mxu0
        %v565 = vadd.f32 %v438, %v564
        %v566 = vpop.f32.mrb[0].mxu0
        %567 = vmatprep.mubr.bf16.mxu0 0
        %568 = vmatmul.mubr.bf16.gmra.mrb[0].mxu0 %v416
        %v569 = vpop.f32.mrb[0].mxu0
        %v570 = vadd.f32 %v438, %v569
        %v571 = vpop.f32.mrb[0].mxu0
        %v572 = vpop.f32.mrb[0].mxu0
        %v573 = vadd.f32 %v438, %v572
        %v574 = vpop.f32.mrb[0].mxu0
        %575 = vmatprep.mubr.bf16.mxu0 0
        %576 = vmatmul.mubr.bf16.gmra.mrb[0].mxu0 %v417
        %v577 = vpop.f32.mrb[0].mxu0
        %v578 = vadd.f32 %v438, %v577
        %v579 = vpop.f32.mrb[0].mxu0
        %v580 = vpop.f32.mrb[0].mxu0
        %v581 = vadd.f32 %v438, %v580
        %v582 = vpop.f32.mrb[0].mxu0
        %583 = vdwg.mxu0
        %v584 = vmax.f32 %v522, 0.0
        %v585 = vmax.f32 %v525, 0.0
        %v586 = vmax.f32 %v530, 0.0
        %v587 = vmax.f32 %v533, 0.0
        %v588 = vmax.f32 %v538, 0.0
        %v589 = vmax.f32 %v541, 0.0
        %v590 = vmax.f32 %v546, 0.0
        %v591 = vmax.f32 %v549, 0.0
        %v592 = vmax.f32 %v554, 0.0
        %v593 = vmax.f32 %v557, 0.0
        %v594 = vmax.f32 %v562, 0.0
        %v595 = vmax.f32 %v565, 0.0
        %v596 = vmax.f32 %v570, 0.0
        %v597 = vmax.f32 %v573, 0.0
        %v598 = vmax.f32 %v578, 0.0
        %v599 = vmax.f32 %v581, 0.0
        %v600 = vpack.c.bf16 %v585, %v584
        %v601 = vpack.c.bf16 %v587, %v586
        %v602 = vpack.c.bf16 %v589, %v588
        %v603 = vpack.c.bf16 %v591, %v590
        %v604 = vpack.c.bf16 %v593, %v592
        %v605 = vpack.c.bf16 %v595, %v594
        %v606 = vpack.c.bf16 %v597, %v596
        %v607 = vpack.c.bf16 %v599, %v598
        %v608 = vld [vmem:[%s3] sm:$0xf]
        %v609 = vld [vmem:[%s3 + $0x4] sm:$0xf]
        %v610 = vld [vmem:[%s3 + $0x8] sm:$0xf]
        %v611 = vld [vmem:[%s3 + $0xc] sm:$0xf]
        %v612 = vld [vmem:[%s3 + $0x10] sm:$0xf]
        %v613 = vld [vmem:[%s3 + $0x14] sm:$0xf]
        %v614 = vld [vmem:[%s3 + $0x18] sm:$0xf]
        %v615 = vld [vmem:[%s3 + $0x1c] sm:$0xf]
        %v616 = vld [vmem:[%s3 + $0x20] sm:$0xf]
        %v617 = vld [vmem:[%s3 + $0x24] sm:$0xf]
        %v618 = vld [vmem:[%s3 + $0x28] sm:$0xf]
        %v619 = vld [vmem:[%s3 + $0x2c] sm:$0xf]
        %v620 = vld [vmem:[%s3 + $0x30] sm:$0xf]
        %v621 = vld [vmem:[%s3 + $0x34] sm:$0xf]
        %v622 = vld [vmem:[%s3 + $0x38] sm:$0xf]
        %v623 = vld [vmem:[%s3 + $0x3c] sm:$0xf]
        %v624 = vld [vmem:[%s4 + $0x2] sm:$0x1]
        %v625 = vlaneseq
        %v626 = vshrl.u32 %v625, 7
        %v627 = vsub.s32 0, %v626
        %v628 = vrot.slane %v624, %v627
        %v645 = vunpack.c.l.b16 %v608
        %v646 = vunpack.c.l.b16 %v609
        %v647 = vunpack.c.l.b16 %v610
        %v648 = vunpack.c.l.b16 %v611
        %v649 = vunpack.c.l.b16 %v612
        %v650 = vunpack.c.l.b16 %v613
        %v651 = vunpack.c.l.b16 %v614
        %v652 = vunpack.c.l.b16 %v615
        %v653 = vunpack.c.l.b16 %v616
        %v654 = vunpack.c.l.b16 %v617
        %v655 = vunpack.c.l.b16 %v618
        %v656 = vunpack.c.l.b16 %v619
        %v657 = vunpack.c.l.b16 %v620
        %v658 = vunpack.c.l.b16 %v621
        %v659 = vunpack.c.l.b16 %v622
        %v660 = vunpack.c.l.b16 %v623
        %v661 = vpack.c.b16 %v646, %v645
        %v662 = vpack.c.b16 %v648, %v647
        %v663 = vpack.c.b16 %v650, %v649
        %v664 = vpack.c.b16 %v652, %v651
        %v665 = vpack.c.b16 %v654, %v653
        %v666 = vpack.c.b16 %v656, %v655
        %v667 = vpack.c.b16 %v658, %v657
        %v668 = vpack.c.b16 %v660, %v659
        %677 = vmatprep.subr.bf16.mxu0 0
        %678 = vmatpush1.bf16.msra.mxu0 %v661
        %679 = vmatprep.subr.bf16.mxu0 0
        %680 = vmatpush1.bf16.msra.mxu0 %v662
        %681 = vmatprep.subr.bf16.mxu0 0
        %682 = vmatpush1.bf16.msra.mxu0 %v663
        %683 = vmatprep.subr.bf16.mxu0 0
        %684 = vmatpush1.bf16.msra.mxu0 %v664
        %685 = vmatprep.subr.bf16.mxu0 0
        %686 = vmatpush1.bf16.msra.mxu0 %v665
        %687 = vmatprep.subr.bf16.mxu0 0
        %688 = vmatpush1.bf16.msra.mxu0 %v666
        %689 = vmatprep.subr.bf16.mxu0 0
        %690 = vmatpush1.bf16.msra.mxu0 %v667
        %691 = vmatprep.subr.bf16.mxu0 0
        %692 = vmatpush1.bf16.msra.mxu0 %v668
        %693 = vmatprep.subr.bf16.mxu0 0
        %694 = vmatpush1.bf16.msra.mxu0 0
        %695 = vmatprep.subr.bf16.mxu0 0
        %696 = vmatpush1.bf16.msra.mxu0 0
        %697 = vmatprep.subr.bf16.mxu0 0
        %698 = vmatpush1.bf16.msra.mxu0 0
        %699 = vmatprep.subr.bf16.mxu0 0
        %700 = vmatpush1.bf16.msra.mxu0 0
        %701 = vmatprep.subr.bf16.mxu0 0
        %702 = vmatpush1.bf16.msra.mxu0 0
        %703 = vmatprep.subr.bf16.mxu0 0
        %704 = vmatpush1.bf16.msra.mxu0 0
        %705 = vmatprep.subr.bf16.mxu0 0
        %706 = vmatpush1.bf16.msra.mxu0 0
        %707 = vmatprep.subr.bf16.mxu0 0
        %708 = vmatpush1.bf16.msra.mxu0 0
        %709 = vmatprep.mubr.bf16.mxu0 0
        %710 = vmatmul.mubr.bf16.gmra.mrb[0].mxu0 %v600
        %v711 = vpop.f32.mrb[0].mxu0
        %v712 = vadd.f32 %v628, %v711
        %v713 = vpop.f32.mrb[0].mxu0
        %v714 = vpop.f32.mrb[0].mxu0
        %v715 = vadd.f32 %v628, %v714
        %v716 = vpop.f32.mrb[0].mxu0
        %717 = vmatprep.mubr.bf16.mxu0 0
        %718 = vmatmul.mubr.bf16.gmra.mrb[0].mxu0 %v601
        %v719 = vpop.f32.mrb[0].mxu0
        %v720 = vadd.f32 %v628, %v719
        %v721 = vpop.f32.mrb[0].mxu0
        %v722 = vpop.f32.mrb[0].mxu0
        %v723 = vadd.f32 %v628, %v722
        %v724 = vpop.f32.mrb[0].mxu0
        %725 = vmatprep.mubr.bf16.mxu0 0
        %726 = vmatmul.mubr.bf16.gmra.mrb[0].mxu0 %v602
        %v727 = vpop.f32.mrb[0].mxu0
        %v728 = vadd.f32 %v628, %v727
        %v729 = vpop.f32.mrb[0].mxu0
        %v730 = vpop.f32.mrb[0].mxu0
        %v731 = vadd.f32 %v628, %v730
        %v732 = vpop.f32.mrb[0].mxu0
        %733 = vmatprep.mubr.bf16.mxu0 0
        %734 = vmatmul.mubr.bf16.gmra.mrb[0].mxu0 %v603
        %v735 = vpop.f32.mrb[0].mxu0
        %v736 = vadd.f32 %v628, %v735
        %v737 = vpop.f32.mrb[0].mxu0
        %v738 = vpop.f32.mrb[0].mxu0
        %v739 = vadd.f32 %v628, %v738
        %v740 = vpop.f32.mrb[0].mxu0
        %741 = vmatprep.mubr.bf16.mxu0 0
        %742 = vmatmul.mubr.bf16.gmra.mrb[0].mxu0 %v604
        %v743 = vpop.f32.mrb[0].mxu0
        %v744 = vadd.f32 %v628, %v743
        %v745 = vpop.f32.mrb[0].mxu0
        %v746 = vpop.f32.mrb[0].mxu0
        %v747 = vadd.f32 %v628, %v746
        %v748 = vpop.f32.mrb[0].mxu0
        %749 = vmatprep.mubr.bf16.mxu0 0
        %750 = vmatmul.mubr.bf16.gmra.mrb[0].mxu0 %v605
        %v751 = vpop.f32.mrb[0].mxu0
        %v752 = vadd.f32 %v628, %v751
        %v753 = vpop.f32.mrb[0].mxu0
        %v754 = vpop.f32.mrb[0].mxu0
        %v755 = vadd.f32 %v628, %v754
        %v756 = vpop.f32.mrb[0].mxu0
        %757 = vmatprep.mubr.bf16.mxu0 0
        %758 = vmatmul.mubr.bf16.gmra.mrb[0].mxu0 %v606
        %v759 = vpop.f32.mrb[0].mxu0
        %v760 = vadd.f32 %v628, %v759
        %v761 = vpop.f32.mrb[0].mxu0
        %v762 = vpop.f32.mrb[0].mxu0
        %v763 = vadd.f32 %v628, %v762
        %v764 = vpop.f32.mrb[0].mxu0
        %765 = vmatprep.mubr.bf16.mxu0 0
        %766 = vmatmul.mubr.bf16.gmra.mrb[0].mxu0 %v607
        %v767 = vpop.f32.mrb[0].mxu0
        %v768 = vadd.f32 %v628, %v767
        %v769 = vpop.f32.mrb[0].mxu0
        %v770 = vpop.f32.mrb[0].mxu0
        %v771 = vadd.f32 %v628, %v770
        %v772 = vpop.f32.mrb[0].mxu0
        %773 = vdwg.mxu0
        %v774 = vpack.c.bf16 %v715, %v712
        %v775 = vpack.c.bf16 %v723, %v720
        %v776 = vpack.c.bf16 %v731, %v728
        %v777 = vpack.c.bf16 %v739, %v736
        %v778 = vpack.c.bf16 %v747, %v744
        %v779 = vpack.c.bf16 %v755, %v752
        %v780 = vpack.c.bf16 %v763, %v760
        %v781 = vpack.c.bf16 %v771, %v768
        %v790 = vunpack.c.l.b16 %v774
        %v791 = vunpack.c.h.b16 %v774
        %v792 = vunpack.c.l.b16 %v775
        %v793 = vunpack.c.h.b16 %v775
        %v794 = vunpack.c.l.b16 %v776
        %v795 = vunpack.c.h.b16 %v776
        %v796 = vunpack.c.l.b16 %v777
        %v797 = vunpack.c.h.b16 %v777
        %v798 = vunpack.c.l.b16 %v778
        %v799 = vunpack.c.h.b16 %v778
        %v800 = vunpack.c.l.b16 %v779
        %v801 = vunpack.c.h.b16 %v779
        %v802 = vunpack.c.l.b16 %v780
        %v803 = vunpack.c.h.b16 %v780
        %v804 = vunpack.c.l.b16 %v781
        %v805 = vunpack.c.h.b16 %v781
        %v806 = vpack.c.b16 %v790, %v790
        %v807 = vpack.c.b16 %v791, %v791
        %v808 = vpack.c.b16 %v792, %v792
        %v809 = vpack.c.b16 %v793, %v793
        %v810 = vpack.c.b16 %v794, %v794
        %v811 = vpack.c.b16 %v795, %v795
        %v812 = vpack.c.b16 %v796, %v796
        %v813 = vpack.c.b16 %v797, %v797
        %v814 = vpack.c.b16 %v798, %v798
        %v815 = vpack.c.b16 %v799, %v799
        %v816 = vpack.c.b16 %v800, %v800
        %v817 = vpack.c.b16 %v801, %v801
        %v818 = vpack.c.b16 %v802, %v802
        %v819 = vpack.c.b16 %v803, %v803
        %v820 = vpack.c.b16 %v804, %v804
        %v821 = vpack.c.b16 %v805, %v805
        %838 = vst [vmem:[%s218] sm:$0xf] %v806
        %839 = vst [vmem:[%s218 + $0x4] sm:$0xf] %v807
        %840 = vst [vmem:[%s218 + $0x8] sm:$0xf] %v808
        %841 = vst [vmem:[%s218 + $0xc] sm:$0xf] %v809
        %842 = vst [vmem:[%s218 + $0x10] sm:$0xf] %v810
        %843 = vst [vmem:[%s218 + $0x14] sm:$0xf] %v811
        %844 = vst [vmem:[%s218 + $0x18] sm:$0xf] %v812
        %845 = vst [vmem:[%s218 + $0x1c] sm:$0xf] %v813
        %846 = vst [vmem:[%s218 + $0x20] sm:$0xf] %v814
        %847 = vst [vmem:[%s218 + $0x24] sm:$0xf] %v815
        %848 = vst [vmem:[%s218 + $0x28] sm:$0xf] %v816
        %849 = vst [vmem:[%s218 + $0x2c] sm:$0xf] %v817
        %850 = vst [vmem:[%s218 + $0x30] sm:$0xf] %v818
        %851 = vst [vmem:[%s218 + $0x34] sm:$0xf] %v819
        %852 = vst [vmem:[%s218 + $0x38] sm:$0xf] %v820
        %853 = vst [vmem:[%s218 + $0x3c] sm:$0xf] %v821
        %s854 = sand.u32 %s137, 1
        %s855 = scalar_lea.sflag [#allocation3], %s854
        %s856 = sand.u32 %s137, 1
        %s857 = smul.addr %s856, 64
        %s858 = scalar_lea.vmem [#allocation2], %s857
        // Predicated region
        $region41: #{tpu_custom_call.1} parent=39 // pred_check
          %p859 = pneg %p147
        $region42: #{tpu_custom_call.1} parent=39 // pred_check_branch
          %861 = sbr.rel (%p859) target = $region44
        $region43: #{tpu_custom_call.1} parent=39 // pred_region
          %s862 = smul.u32 16, %s19
          %s864 = ssub.s32 1024, 1024
          %865 = vsyncadd %s855, %s864
          %s866 = smul.addr %s862, 64
          %s867 = scalar_lea.hbm %s5, %s866
          %s868 = sshll.u32 %s858, 4
          %s869 = int_to_ptr.vmem [resolvable:$true] %s868
          %874 = dma.vmem_to_hbm [thread:$0]  %s869, 1024, %s867, %s855, 64, 64, 4
        $region44: #{tpu_custom_call.1} parent=39 // pred_fallthru
          _
      $region40: #{tpu_custom_call.1} parent=5 // pred_fallthru
        _
      %p875 = scmp.le.s32.totalorder 2, %s14
      // Predicated region
      $region45: #{tpu_custom_call.1} parent=5 // pred_check
        %p876 = pneg %p875
      $region46: #{tpu_custom_call.1} parent=5 // pred_check_branch
        %878 = sbr.rel (%p876) target = $region48
      $region47: #{tpu_custom_call.1} parent=5 // pred_region
        %s879 = ssub.s32 %s14, 2
        // Predicated region
        $region49: #{tpu_custom_call.1} parent=47 // pred_check
          %p880 = pneg %p153
        $region50: #{tpu_custom_call.1} parent=47 // pred_check_branch
          %882 = sbr.rel (%p880) target = $region52
        $region51: #{tpu_custom_call.1} parent=47 // pred_region
          %s883 = sand.u32 %s138, 1
          %s884 = scalar_lea.sflag [#allocation3], %s883
          %s885 = sand.u32 %s138, 1
          %s886 = smul.addr %s885, 64
          %s887 = scalar_lea.vmem [#allocation2], %s886
          %888 = dma.done %s884, 1024
        $region52: #{tpu_custom_call.1} parent=47 // pred_fallthru
          _
      $region48: #{tpu_custom_call.1} parent=5 // pred_fallthru
        _
    $region6: #{tpu_custom_call.1} parent=1 // loop_footer
      %s18 = sadd.s32 1, %s14
    $region7: #{tpu_custom_call.1} parent=1 // loop_footer_branch
      %13 = sbr.rel target = $region3
    $region8: #{tpu_custom_call.1} parent=1 // loop_exit
      _
    %889 = vsyncpa [#allocation3], 1
    %s890 = scalar_lea.sflag [#allocation3], 1
    %891 = vsyncpa %s890, 1

</llo_original>
